<compile_context>
chip_gen: v7x
topology: tpu7x:2x2x1
jax: 0.10.0
libtpu: 0.0.40
codegen_flags: <defaults>
</compile_context>

<pallas_src>
import jax
import jax.numpy as jnp
from jax.experimental import pallas as pl
from jax.experimental.pallas import tpu as pltpu


def _affine_kernel(x_ref, o_ref):
    """((x + 2) * 3 - 4) / 5 with torch-matching dtype semantics."""
    x = x_ref[...]
    if jnp.issubdtype(x_ref.dtype, jnp.floating):
        xf = x.astype(jnp.float32)
        y = ((xf + 2.0) * 3.0 - 4.0) / 5.0
    else:
        # torch: add/mul/sub stay integer (exact), only the div promotes.
        t = x * 3 + 2  # == (x + 2) * 3 - 4 in integer arithmetic
        y = t.astype(jnp.float32) / 5.0
    o_ref[...] = y.astype(o_ref.dtype)


def _chip_tuning():
    """(block budget bytes, minimum grid steps) keyed off the device kind."""
    try:
        kind = jax.devices()[0].device_kind.lower()
    except Exception:
        kind = ""
    block_bytes = (2 << 20) if "v5" in kind else (4 << 20)
    min_grid_steps = 2 if ("v7" in kind or "7x" in kind) else 1
    return block_bytes, min_grid_steps


def _sublane_multiple(dtype):
    s = jnp.dtype(dtype).itemsize
    if s >= 4:
        return 8
    return 8 * (4 // s)  # 16 for 2-byte, 32 for 1-byte dtypes


def pt_module_forward(x, donate=False):
    """Applies ((x + 2) * 3 - 4) / 5 elementwise via a Pallas TPU kernel."""
    orig_shape = x.shape
    in_dtype = x.dtype

    if jnp.issubdtype(in_dtype, jnp.floating):
        out_dtype = in_dtype
    else:
        out_dtype = jnp.float32  # torch int-tensor / 5 -> float32
        if not jnp.issubdtype(in_dtype, jnp.integer):
            x = x.astype(jnp.int32)  # bool etc. (rare, negligible)

    n = x.size
    if n == 0:
        return jnp.zeros(orig_shape, out_dtype)

    flat = x.reshape(n)
    block_bytes, min_steps = _chip_tuning()
    row_mult = max(_sublane_multiple(x.dtype), _sublane_multiple(out_dtype))
    elem_bytes = max(jnp.dtype(x.dtype).itemsize, jnp.dtype(out_dtype).itemsize)
    target_elems = max(1024, block_bytes // elem_bytes)

    compiler_params = pltpu.CompilerParams(
        dimension_semantics=("parallel",),
        vmem_limit_bytes=32 << 20,
    )

    alias_kwargs = {}
    if donate and out_dtype == x.dtype:
        alias_kwargs["input_output_aliases"] = {0: 0}

    if n % 128 == 0:
        # -------- main path: lane-dense 2-D slab, no padding ----------------
        lane_width = 128
        for cand in (4096, 2048, 1024, 512, 256, 128):
            if n % cand == 0 and (n // cand) >= row_mult:
                lane_width = cand
                break
        rows = n // lane_width
        x2d = flat.reshape(rows, lane_width)

        tile_rows = max(row_mult,
                        (target_elems // lane_width) // row_mult * row_mult)
        # v7x: keep at least `min_steps` grid steps so both TensorCores (and
        # their DMA paths) are used instead of collapsing to a 1-step grid.
        if min_steps > 1 and rows > row_mult:
            half = (rows + min_steps - 1) // min_steps
            cap = ((half + row_mult - 1) // row_mult) * row_mult
            tile_rows = min(tile_rows, cap)
        if tile_rows >= rows:
            tile_rows = rows  # full-dim block: legal for any row count
        grid = (pl.cdiv(rows, tile_rows),)  # ragged last block handled by Pallas

        out2d = pl.pallas_call(
            _affine_kernel,
            out_shape=jax.ShapeDtypeStruct((rows, lane_width), out_dtype),
            grid=grid,
            in_specs=[pl.BlockSpec((tile_rows, lane_width), lambda i: (i, 0))],
            out_specs=pl.BlockSpec((tile_rows, lane_width), lambda i: (i, 0)),
            compiler_params=compiler_params,
            **alias_kwargs,
        )(x2d)
        return out2d.reshape(orig_shape)

    # -------- ragged path: n % 128 != 0 -------------------------------------
    # 1-D grid directly over the flat array; Pallas masks the ragged last
    # block, so there is no jnp.pad / trailing slice (no extra HBM passes).
    if n < 128:
        block = n                      # full-array block (always legal)
    elif n < 1024:
        block = (n // 128) * 128       # multiple of 128, <= n
    else:
        block = min((target_elems // 1024) * 1024, (n // 1024) * 1024)
        block = max(block, 1024)
    grid = (pl.cdiv(n, block),)

    out_flat = pl.pallas_call(
        _affine_kernel,
        out_shape=jax.ShapeDtypeStruct((n,), out_dtype),
        grid=grid,
        in_specs=[pl.BlockSpec((block,), lambda i: (i,))],
        out_specs=pl.BlockSpec((block,), lambda i: (i,)),
        compiler_params=compiler_params,
        **alias_kwargs,
    )(flat)
    return out_flat.reshape(orig_shape)


if __name__ == "__main__":
    key = jax.random.PRNGKey(0)
    k1, k2, k3 = jax.random.split(key, 3)

    # 1) NCHW float input like the PyTorch module would receive.
    x = jax.random.normal(k1, (2, 4, 16, 16), dtype=jnp.float32)
    y = jax.block_until_ready(pt_module_forward(x))
    y_ref = ((x + 2.0) * 3.0 - 4.0) / 5.0
    assert y.shape == x.shape and y.dtype == x.dtype
    assert jnp.allclose(y, y_ref, rtol=1e-5, atol=1e-6)

    # 2) Non-128-divisible element count (exercises the ragged 1-D path).
    xr = jax.random.normal(k2, (7, 300), dtype=jnp.float32)  # 2100 elements
    yr = jax.block_until_ready(pt_module_forward(xr))
    yr_ref = ((xr + 2.0) * 3.0 - 4.0) / 5.0
    assert yr.shape == xr.shape and yr.dtype == xr.dtype
    assert jnp.allclose(yr, yr_ref, rtol=1e-5, atol=1e-6)

    # 3) Integer input (promotion handled inside the kernel, like torch.div).
    xi = jax.random.randint(k3, (2, 4, 16, 16), -100, 100, dtype=jnp.int32)
    yi = jax.block_until_ready(pt_module_forward(xi))
    yi_ref = ((xi + 2) * 3 - 4) / 5
    assert yi.shape == xi.shape and yi.dtype == jnp.float32
    assert jnp.allclose(yi, yi_ref, rtol=1e-6, atol=1e-6)

    print("KERNEL_OK")
</pallas_src>

<mosaic_0001>
module attributes {stable_mosaic.version = 11 : i64} {
  func.func @_affine_kernel(%arg0: i32, %arg1: memref<8x256xf32, #tpu.memory_space<vmem>>, %arg2: memref<8x256xf32, #tpu.memory_space<vmem>>) attributes {dimension_semantics = [#tpu.dimension_semantics<parallel>], iteration_bounds = array<i64: 1>, scalar_prefetch = 0 : i64, scratch_operands = 0 : i64, tpu.core_type = #tpu.core_type<tc>, window_params = [{transform_indices = @transform_0, window_bounds = array<i64: 8, 256>}, {transform_indices = @transform_1, window_bounds = array<i64: 8, 256>}]} {
    %c0 = arith.constant 0 : index
    %c0_0 = arith.constant 0 : index
    %0 = vector.load %arg1[%c0, %c0_0] : memref<8x256xf32, #tpu.memory_space<vmem>>, vector<8x256xf32>
    %cst = arith.constant 2.000000e+00 : f32
    %1 = vector.broadcast %cst : f32 to vector<8x256xf32>
    %2 = arith.addf %0, %1 : vector<8x256xf32>
    %cst_1 = arith.constant 3.000000e+00 : f32
    %3 = vector.broadcast %cst_1 : f32 to vector<8x256xf32>
    %4 = arith.mulf %2, %3 : vector<8x256xf32>
    %cst_2 = arith.constant 4.000000e+00 : f32
    %5 = vector.broadcast %cst_2 : f32 to vector<8x256xf32>
    %6 = arith.subf %4, %5 : vector<8x256xf32>
    %cst_3 = arith.constant 5.000000e+00 : f32
    %7 = vector.broadcast %cst_3 : f32 to vector<8x256xf32>
    %8 = arith.divf %6, %7 : vector<8x256xf32>
    %c0_4 = arith.constant 0 : index
    %c0_5 = arith.constant 0 : index
    %9 = vector.load %arg2[%c0_4, %c0_5] : memref<8x256xf32, #tpu.memory_space<vmem>>, vector<8x256xf32>
    tpu.vector_store %arg2[%c0_4, %c0_5], %8 {strides = array<i32>} : memref<8x256xf32, #tpu.memory_space<vmem>>, vector<8x256xf32>,
    return
  }
  func.func @transform_0(%arg0: i32) -> (i32, i32) {
    %c0_i32 = arith.constant 0 : i32
    %c0_i32_0 = arith.constant 0 : i32
    return %arg0, %c0_i32 : i32, i32
  }
  func.func @transform_1(%arg0: i32) -> (i32, i32) {
    %c0_i32 = arith.constant 0 : i32
    %c0_i32_0 = arith.constant 0 : i32
    return %arg0, %c0_i32 : i32, i32
  }
}

</mosaic_0001>

<llo_original>
// kernel: tpu_custom_call.1
$region0: #{tpu_custom_call.1}
  #allocation0 [shape = 'u32[]', space=smem, size = 0x4, offset = 0x4, fixed_abs, tag = 'smem constant byte address 0x4 - core index']
  #allocation1 [shape = 'u32[144,128]{1,0:T(1,128)}', space=vmem, size = 0x12000, scoped, tag = 'internal scratch']
  %s0 = inlined_call_operand.hbm [shape: f32[8,256], index: 0, kind: input, shape index: {}]
  %s1 = inlined_call_operand.hbm [shape: f32[8,256], index: 1, kind: output, shape index: {}]
  %s2 = sld [smem:[#allocation0]]
  $region18: #{tpu_custom_call.1} parent=0
    _
  %s4 = ssub.s32 1, %s2
  %s5 = scalar_select 0, %s4, %s2
  $region1: #{tpu_custom_call.1} parent=0
    #allocation2 [shape = 'u8[8192]{0}', space=vmem, size = 0x2000, scoped, tag = 'input window, operand 0, single buffered']
    #allocation3 [shape = 's32[1]{0}', space=sflag, size = 0x4, scoped, tag = 'scoped memory for tpu_custom_call.1']
    #allocation4 [shape = 's32[1]{0}', space=sflag, size = 0x4, scoped, tag = 'scoped memory for tpu_custom_call.1']
    #allocation5 [shape = 'u8[8192]{0}', space=vmem, size = 0x2000, scoped, tag = 'output window, operand 0, single buffered']
    %6 = vsyncpa [#allocation3], 0
    %7 = vsyncpa [#allocation4], 0
    // Predicated region
    $region2: #{tpu_custom_call.1} parent=1 // pred_check
      _
    $region3: #{tpu_custom_call.1} parent=1 // pred_check_branch
      %9 = sbr.rel (0) target = $region5
    $region4: #{tpu_custom_call.1} parent=1 // pred_region
      %s11 = ssub.s32 256, 256
      %12 = vsyncadd [#allocation3], %s11
      %s14 = sshll.u32 [#allocation2], 4
      %s15 = int_to_ptr.vmem [resolvable:$true] %s14
      %17 = dma.hbm_to_vmem [thread:$0]  %s0, 256, %s15, [#allocation3]
    $region5: #{tpu_custom_call.1} parent=1 // pred_fallthru
      _
    // Predicated region
    $region6: #{tpu_custom_call.1} parent=1 // pred_check
      _
    $region7: #{tpu_custom_call.1} parent=1 // pred_check_branch
      %19 = sbr.rel (0) target = $region9
    $region8: #{tpu_custom_call.1} parent=1 // pred_region
      %20 = dma.done [#allocation3], 256
    $region9: #{tpu_custom_call.1} parent=1 // pred_fallthru
      _
    %v21 = vld [vmem:[#allocation2] sm:$0xff]
    %v22 = vld [vmem:[#allocation2 + $0x8] sm:$0xff]
    %v23 = vadd.f32 %v21, 2.0
    %v24 = vadd.f32 %v22, 2.0
    %v25 = vmul.f32 %v23, 3.0
    %v26 = vmul.f32 %v24, 3.0
    %v27 = vsub.f32 %v25, 4.0
    %v28 = vsub.f32 %v26, 4.0
    %v29 = vrcp.pop 5.0
    %v30 = vmul.f32 %v27, %v29
    %v31 = vmul.f32 %v28, %v29
    %32 = vst [vmem:[#allocation5] sm:$0xff] %v30
    %33 = vst [vmem:[#allocation5 + $0x8] sm:$0xff] %v31
    // Predicated region
    $region10: #{tpu_custom_call.1} parent=1 // pred_check
      _
    $region11: #{tpu_custom_call.1} parent=1 // pred_check_branch
      %35 = sbr.rel (0) target = $region13
    $region12: #{tpu_custom_call.1} parent=1 // pred_region
      %s37 = ssub.s32 256, 256
      %38 = vsyncadd [#allocation4], %s37
      %s40 = sshll.u32 [#allocation5], 4
      %s41 = int_to_ptr.vmem [resolvable:$true] %s40
      %43 = dma.vmem_to_hbm [thread:$0]  %s41, 256, %s1, [#allocation4]
    $region13: #{tpu_custom_call.1} parent=1 // pred_fallthru
      _
    // Predicated region
    $region14: #{tpu_custom_call.1} parent=1 // pred_check
      _
    $region15: #{tpu_custom_call.1} parent=1 // pred_check_branch
      %45 = sbr.rel (0) target = $region17
    $region16: #{tpu_custom_call.1} parent=1 // pred_region
      %46 = dma.done [#allocation4], 256
    $region17: #{tpu_custom_call.1} parent=1 // pred_fallthru
      _
    %47 = vsyncpa [#allocation3], 1
    %48 = vsyncpa [#allocation4], 1

</llo_original>
